<compile_context>
chip_gen: v5e
topology: v5e:2x2
jax: 0.10.0
libtpu: 0.0.40
codegen_flags: <defaults>
</compile_context>

<pallas_src>
import math
import jax
import jax.numpy as jnp
from jax.experimental import pallas as pl
from jax.experimental.pallas import tpu as pltpu


LANE = 128
SUB = 16  # batch-row rounding (covers bf16 sublane packing of the output)


def _round_up(n, m):
    return ((n + m - 1) // m) * m


# ----------------------------------------------------------------------------
# Kernel: one batch tile does the full fused MLP (4 MXU matmuls + bias/ReLU).
# Weights are bf16, activations are cast bf16 -> dot -> f32 accumulate.
# ----------------------------------------------------------------------------
def mlp_kernel(x_ref, w1_ref, w2_ref, w3_ref, w4_ref, b_ref, o_ref):
    d1 = w1_ref.shape[1]
    d2 = w2_ref.shape[1]
    d3 = w3_ref.shape[1]
    d4 = w4_ref.shape[1]

    # cast only the (tiny) activation tile to bf16 for the MXU; accumulate f32
    h = x_ref[...].astype(jnp.bfloat16)

    h = jnp.dot(h, w1_ref[...], preferred_element_type=jnp.float32) + b_ref[0:1, 0:d1]
    h = jnp.maximum(h, 0.0).astype(jnp.bfloat16)

    h = jnp.dot(h, w2_ref[...], preferred_element_type=jnp.float32) + b_ref[1:2, 0:d2]
    h = jnp.maximum(h, 0.0).astype(jnp.bfloat16)

    h = jnp.dot(h, w3_ref[...], preferred_element_type=jnp.float32) + b_ref[2:3, 0:d3]
    h = jnp.maximum(h, 0.0).astype(jnp.bfloat16)

    h = jnp.dot(h, w4_ref[...], preferred_element_type=jnp.float32) + b_ref[3:4, 0:d4]

    o_ref[...] = h.astype(o_ref.dtype)  # bf16, lane-dense 128-wide store


# ----------------------------------------------------------------------------
# Parameter handling
# ----------------------------------------------------------------------------
def init_params(key, in_dim=(30, 9), out_dim=(10,), layers=(300, 200, 100)):
    """Raw f32 params mirroring nn.Linear default init; W stored [in, out]."""
    dims = [math.prod(in_dim)] + list(layers) + [math.prod(out_dim)]
    params = {}
    for i in range(len(dims) - 1):
        fan_in, fan_out = dims[i], dims[i + 1]
        key, kw, kb = jax.random.split(key, 3)
        bound = 1.0 / math.sqrt(fan_in)
        params[f"w{i+1}"] = jax.random.uniform(
            kw, (fan_in, fan_out), jnp.float32, minval=-bound, maxval=bound)
        params[f"b{i+1}"] = jax.random.uniform(
            kb, (fan_out,), jnp.float32, minval=-bound, maxval=bound)
    return params


def pack_params(params):
    """Lane-pad weight OUTPUT dims (and matching input dims of later layers),
    cast to bf16, pack biases into one padded f32 operand.  W1 keeps its raw
    270 input rows (no feature padding of x needed).  Zero padding preserves
    the math exactly."""
    ws = [params[f"w{i}"] for i in range(1, 5)]
    bs = [params[f"b{i}"] for i in range(1, 5)]
    dims = [ws[0].shape[0]] + [w.shape[1] for w in ws]        # 270,300,200,100,10
    out_pdims = [_round_up(d, LANE) for d in dims[1:]]        # 384,256,128,128
    in_pdims = [dims[0]] + out_pdims[:-1]                     # 270,384,256,128

    wpad = []
    for i, w in enumerate(ws):
        wp = jnp.pad(w, ((0, in_pdims[i] - w.shape[0]),
                         (0, out_pdims[i] - w.shape[1])))
        wpad.append(wp.astype(jnp.bfloat16))

    bmax = max(out_pdims)
    b_packed = jnp.zeros((8, bmax), jnp.float32)              # sublane-padded rows
    for i, b in enumerate(bs):
        b_packed = b_packed.at[i, :b.shape[0]].set(b)

    return {
        "w1p": wpad[0], "w2p": wpad[1], "w3p": wpad[2], "w4p": wpad[3],
        "b_packed": b_packed,
        "in_features": dims[0], "out_features": dims[-1],
    }


# ----------------------------------------------------------------------------
# Forward wrapper
# ----------------------------------------------------------------------------
def _choose_batch_tile(B):
    """Pick (tm, b_pad, grid). Batch is only padded to a packing multiple of
    16; large batches use grid = cdiv so no full-tile batch padding.  For
    b_pad >= 512 we guarantee >= 2 grid steps so a v7x megacore can shard the
    'parallel' batch axis across both TensorCores."""
    b_pad = _round_up(max(B, SUB), SUB)
    if b_pad < 512:
        return b_pad, b_pad, 1                       # single grid step
    tm = min(1024, _round_up(b_pad // 2, SUB))       # >= 2 steps, cap at 1024
    return tm, b_pad, pl.cdiv(b_pad, tm)


def mlp_forward(x, kp):
    """x: [B, *in_dim] float32.  kp: packed params from pack_params()."""
    B = x.shape[0]
    x2d = x.reshape(B, -1).astype(jnp.float32)       # nn.Flatten(1)

    d_in = kp["w1p"].shape[0]                        # 270 (unpadded K)
    d_out_pad = kp["w4p"].shape[1]                   # 128
    tm, b_pad, grid = _choose_batch_tile(B)

    # only a tiny batch-row pad (to a packing multiple); no feature padding
    x_in = x2d if b_pad == B else jnp.pad(x2d, ((0, b_pad - B), (0, 0)))

    const = lambda a: pl.BlockSpec(a.shape, lambda i: (0, 0))   # VMEM-resident

    out = pl.pallas_call(
        mlp_kernel,
        out_shape=jax.ShapeDtypeStruct((b_pad, d_out_pad), jnp.bfloat16),
        grid=(grid,),
        in_specs=[
            pl.BlockSpec((tm, d_in), lambda i: (i, 0)),          # x: batch-tiled
            const(kp["w1p"]), const(kp["w2p"]),
            const(kp["w3p"]), const(kp["w4p"]),
            const(kp["b_packed"]),
        ],
        out_specs=pl.BlockSpec((tm, d_out_pad), lambda i: (i, 0)),
        compiler_params=pltpu.CompilerParams(
            dimension_semantics=("parallel",)),
    )(x_in, kp["w1p"], kp["w2p"], kp["w3p"], kp["w4p"], kp["b_packed"])

    # rows >= B (and any partial-last-block rows) are garbage by design; drop.
    out = out[:B, :kp["out_features"]].astype(jnp.float32)
    # torch: .squeeze(1) — only removes dim 1 if it has size 1.
    if out.shape[1] == 1:
        out = jnp.squeeze(out, axis=1)
    return out


# ----------------------------------------------------------------------------
# References
# ----------------------------------------------------------------------------
def mlp_reference_f32(x, params):
    h = x.reshape(x.shape[0], -1)
    for i in range(1, 5):
        h = h @ params[f"w{i}"] + params[f"b{i}"]
        if i < 4:
            h = jnp.maximum(h, 0.0)
    if h.shape[1] == 1:
        h = jnp.squeeze(h, axis=1)
    return h


def mlp_reference_bf16(x, params):
    """Matched precision: bf16 operands, f32 accumulation, bf16 final store
    (same as the kernel)."""
    h = x.reshape(x.shape[0], -1).astype(jnp.float32)
    for i in range(1, 5):
        w = params[f"w{i}"].astype(jnp.bfloat16)
        h = jnp.dot(h.astype(jnp.bfloat16), w,
                    preferred_element_type=jnp.float32) + params[f"b{i}"]
        if i < 4:
            h = jnp.maximum(h, 0.0)
    h = h.astype(jnp.bfloat16).astype(jnp.float32)   # match kernel's bf16 output
    if h.shape[1] == 1:
        h = jnp.squeeze(h, axis=1)
    return h


if __name__ == "__main__":
    key = jax.random.PRNGKey(0)
    kx, kp_key = jax.random.split(key)

    B, in_dim, out_dim, layers = 4, (30, 9), (10,), (300, 200, 100)
    x = jax.random.normal(kx, (B, *in_dim), dtype=jnp.float32)

    params = init_params(kp_key, in_dim, out_dim, layers)
    kp = pack_params(params)

    out = mlp_forward(x, kp)
    out = jax.block_until_ready(out)

    assert out.shape == (B, math.prod(out_dim)), out.shape

    ref_matched = mlp_reference_bf16(x, params)
    assert jnp.allclose(out, ref_matched, atol=2e-2, rtol=2e-2), \
        "mismatch vs matched-precision reference"

    ref_f32 = mlp_reference_f32(x, params)
    assert jnp.allclose(out, ref_f32, atol=0.5, rtol=0.1), \
        "mismatch vs f32 reference (beyond bf16 tolerance)"

    print("KERNEL_OK")
</pallas_src>

<mosaic_0001>
module attributes {stable_mosaic.version = 11 : i64} {
  func.func @mlp_kernel(%arg0: i32, %arg1: memref<16x270xf32, #tpu.memory_space<vmem>>, %arg2: memref<270x384xbf16, #tpu.memory_space<vmem>>, %arg3: memref<384x256xbf16, #tpu.memory_space<vmem>>, %arg4: memref<256x128xbf16, #tpu.memory_space<vmem>>, %arg5: memref<128x128xbf16, #tpu.memory_space<vmem>>, %arg6: memref<8x384xf32, #tpu.memory_space<vmem>>, %arg7: memref<16x128xbf16, #tpu.memory_space<vmem>>) attributes {dimension_semantics = [#tpu.dimension_semantics<parallel>], iteration_bounds = array<i64: 1>, scalar_prefetch = 0 : i64, scratch_operands = 0 : i64, tpu.core_type = #tpu.core_type<tc>, window_params = [{transform_indices = @transform_0, window_bounds = array<i64: 16, 270>}, {pipeline_mode = #tpu.pipeline_mode<synchronous>, transform_indices = @transform_1, window_bounds = array<i64: 270, 384>}, {pipeline_mode = #tpu.pipeline_mode<synchronous>, transform_indices = @transform_2, window_bounds = array<i64: 384, 256>}, {pipeline_mode = #tpu.pipeline_mode<synchronous>, transform_indices = @transform_3, window_bounds = array<i64: 256, 128>}, {pipeline_mode = #tpu.pipeline_mode<synchronous>, transform_indices = @transform_4, window_bounds = array<i64: 128, 128>}, {pipeline_mode = #tpu.pipeline_mode<synchronous>, transform_indices = @transform_5, window_bounds = array<i64: 8, 384>}, {transform_indices = @transform_6, window_bounds = array<i64: 16, 128>}]} {
    %c0 = arith.constant 0 : index
    %c0_0 = arith.constant 0 : index
    %0 = vector.load %arg1[%c0, %c0_0] : memref<16x270xf32, #tpu.memory_space<vmem>>, vector<16x270xf32>
    %1 = arith.truncf %0 : vector<16x270xf32> to vector<16x270xbf16>
    %c0_1 = arith.constant 0 : index
    %c0_2 = arith.constant 0 : index
    %2 = vector.load %arg2[%c0_1, %c0_2] : memref<270x384xbf16, #tpu.memory_space<vmem>>, vector<270x384xbf16>
    %cst = arith.constant dense<0.000000e+00> : vector<16x384xf32>
    %3 = tpu.matmul %1, %2, %cst {dimension_numbers = #tpu.dot_dimension_numbers<[1], [0], [0], [1], [0, 0, 1, 1], [], []>} : vector<16x270xbf16>, vector<270x384xbf16>, vector<16x384xf32> -> vector<16x384xf32>
    %c0_3 = arith.constant 0 : index
    %c0_4 = arith.constant 0 : index
    %4 = vector.load %arg6[%c0_3, %c0_4] : memref<8x384xf32, #tpu.memory_space<vmem>>, vector<1x384xf32>
    %5 = vector.broadcast %4 : vector<1x384xf32> to vector<16x384xf32>
    %6 = arith.addf %3, %5 : vector<16x384xf32>
    %cst_5 = arith.constant 0.000000e+00 : f32
    %7 = vector.broadcast %cst_5 : f32 to vector<16x384xf32>
    %8 = arith.maximumf %6, %7 : vector<16x384xf32>
    %9 = arith.truncf %8 : vector<16x384xf32> to vector<16x384xbf16>
    %c0_6 = arith.constant 0 : index
    %c0_7 = arith.constant 0 : index
    %10 = vector.load %arg3[%c0_6, %c0_7] : memref<384x256xbf16, #tpu.memory_space<vmem>>, vector<384x256xbf16>
    %cst_8 = arith.constant dense<0.000000e+00> : vector<16x256xf32>
    %11 = tpu.matmul %9, %10, %cst_8 {dimension_numbers = #tpu.dot_dimension_numbers<[1], [0], [0], [1], [0, 0, 1, 1], [], []>} : vector<16x384xbf16>, vector<384x256xbf16>, vector<16x256xf32> -> vector<16x256xf32>
    %c1 = arith.constant 1 : index
    %c0_9 = arith.constant 0 : index
    %12 = vector.load %arg6[%c1, %c0_9] : memref<8x384xf32, #tpu.memory_space<vmem>>, vector<1x256xf32>
    %13 = vector.broadcast %12 : vector<1x256xf32> to vector<16x256xf32>
    %14 = arith.addf %11, %13 : vector<16x256xf32>
    %cst_10 = arith.constant 0.000000e+00 : f32
    %15 = vector.broadcast %cst_10 : f32 to vector<16x256xf32>
    %16 = arith.maximumf %14, %15 : vector<16x256xf32>
    %17 = arith.truncf %16 : vector<16x256xf32> to vector<16x256xbf16>
    %c0_11 = arith.constant 0 : index
    %c0_12 = arith.constant 0 : index
    %18 = vector.load %arg4[%c0_11, %c0_12] : memref<256x128xbf16, #tpu.memory_space<vmem>>, vector<256x128xbf16>
    %cst_13 = arith.constant dense<0.000000e+00> : vector<16x128xf32>
    %19 = tpu.matmul %17, %18, %cst_13 {dimension_numbers = #tpu.dot_dimension_numbers<[1], [0], [0], [1], [0, 0, 1, 1], [], []>} : vector<16x256xbf16>, vector<256x128xbf16>, vector<16x128xf32> -> vector<16x128xf32>
    %c2 = arith.constant 2 : index
    %c0_14 = arith.constant 0 : index
    %20 = vector.load %arg6[%c2, %c0_14] : memref<8x384xf32, #tpu.memory_space<vmem>>, vector<1x128xf32>
    %21 = vector.broadcast %20 : vector<1x128xf32> to vector<16x128xf32>
    %22 = arith.addf %19, %21 : vector<16x128xf32>
    %cst_15 = arith.constant 0.000000e+00 : f32
    %23 = vector.broadcast %cst_15 : f32 to vector<16x128xf32>
    %24 = arith.maximumf %22, %23 : vector<16x128xf32>
    %25 = arith.truncf %24 : vector<16x128xf32> to vector<16x128xbf16>
    %c0_16 = arith.constant 0 : index
    %c0_17 = arith.constant 0 : index
    %26 = vector.load %arg5[%c0_16, %c0_17] : memref<128x128xbf16, #tpu.memory_space<vmem>>, vector<128x128xbf16>
    %cst_18 = arith.constant dense<0.000000e+00> : vector<16x128xf32>
    %27 = tpu.matmul %25, %26, %cst_18 {dimension_numbers = #tpu.dot_dimension_numbers<[1], [0], [0], [1], [0, 0, 1, 1], [], []>} : vector<16x128xbf16>, vector<128x128xbf16>, vector<16x128xf32> -> vector<16x128xf32>
    %c3 = arith.constant 3 : index
    %c0_19 = arith.constant 0 : index
    %28 = vector.load %arg6[%c3, %c0_19] : memref<8x384xf32, #tpu.memory_space<vmem>>, vector<1x128xf32>
    %29 = vector.broadcast %28 : vector<1x128xf32> to vector<16x128xf32>
    %30 = arith.addf %27, %29 : vector<16x128xf32>
    %31 = arith.truncf %30 : vector<16x128xf32> to vector<16x128xbf16>
    %c0_20 = arith.constant 0 : index
    %c0_21 = arith.constant 0 : index
    %32 = vector.load %arg7[%c0_20, %c0_21] : memref<16x128xbf16, #tpu.memory_space<vmem>>, vector<16x128xbf16>
    tpu.vector_store %arg7[%c0_20, %c0_21], %31 {strides = array<i32>} : memref<16x128xbf16, #tpu.memory_space<vmem>>, vector<16x128xbf16>,
    return
  }
  func.func @transform_0(%arg0: i32) -> (i32, i32) {
    %c0_i32 = arith.constant 0 : i32
    %c0_i32_0 = arith.constant 0 : i32
    return %arg0, %c0_i32 : i32, i32
  }
  func.func @transform_1(%arg0: i32) -> (i32, i32) {
    %c0_i32 = arith.constant 0 : i32
    %c0_i32_0 = arith.constant 0 : i32
    %c0_i32_1 = arith.constant 0 : i32
    return %c0_i32, %c0_i32_0 : i32, i32
  }
  func.func @transform_2(%arg0: i32) -> (i32, i32) {
    %c0_i32 = arith.constant 0 : i32
    %c0_i32_0 = arith.constant 0 : i32
    %c0_i32_1 = arith.constant 0 : i32
    return %c0_i32, %c0_i32_0 : i32, i32
  }
  func.func @transform_3(%arg0: i32) -> (i32, i32) {
    %c0_i32 = arith.constant 0 : i32
    %c0_i32_0 = arith.constant 0 : i32
    %c0_i32_1 = arith.constant 0 : i32
    return %c0_i32, %c0_i32_0 : i32, i32
  }
  func.func @transform_4(%arg0: i32) -> (i32, i32) {
    %c0_i32 = arith.constant 0 : i32
    %c0_i32_0 = arith.constant 0 : i32
    %c0_i32_1 = arith.constant 0 : i32
    return %c0_i32, %c0_i32_0 : i32, i32
  }
  func.func @transform_5(%arg0: i32) -> (i32, i32) {
    %c0_i32 = arith.constant 0 : i32
    %c0_i32_0 = arith.constant 0 : i32
    %c0_i32_1 = arith.constant 0 : i32
    return %c0_i32, %c0_i32_0 : i32, i32
  }
  func.func @transform_6(%arg0: i32) -> (i32, i32) {
    %c0_i32 = arith.constant 0 : i32
    %c0_i32_0 = arith.constant 0 : i32
    return %arg0, %c0_i32 : i32, i32
  }
}

</mosaic_0001>

<llo_original>
// kernel: tpu_custom_call.1
$region0: #{tpu_custom_call.1}
  #allocation0 [shape = 'u32[]', space=smem, size = 0x4, offset = 0x4, fixed_abs, tag = 'smem constant byte address 0x4 - core index']
  #allocation1 [shape = 'u32[72,128]{1,0:T(1,128)}', space=vmem, size = 0x9000, scoped, tag = 'internal scratch']
  %s0 = inlined_call_operand.hbm [shape: f32[16,270], index: 0, kind: input, shape index: {}]
  %s1 = inlined_call_operand.hbm [shape: bf16[270,384], index: 1, kind: input, shape index: {}]
  %s2 = inlined_call_operand.hbm [shape: bf16[384,256], index: 2, kind: input, shape index: {}]
  %s3 = inlined_call_operand.hbm [shape: bf16[256,128], index: 3, kind: input, shape index: {}]
  %s4 = inlined_call_operand.hbm [shape: bf16[128,128], index: 4, kind: input, shape index: {}]
  %s5 = inlined_call_operand.hbm [shape: f32[8,384], index: 5, kind: input, shape index: {}]
  %s6 = inlined_call_operand.hbm [shape: bf16[16,128], index: 6, kind: output, shape index: {}]
  %s7 = sld [smem:[#allocation0]]
  $region58: #{tpu_custom_call.1} parent=0
    _
  %s9 = ssub.s32 1, %s7
  %s10 = scalar_select 0, %s9, %s7
  $region1: #{tpu_custom_call.1} parent=0
    #allocation2 [shape = 'u8[24576]{0}', space=vmem, size = 0x6000, scoped, tag = 'input window, operand 0, single buffered']
    #allocation3 [shape = 's32[1]{0}', space=sflag, size = 0x4, scoped, tag = 'scoped memory for tpu_custom_call.1']
    #allocation4 [shape = 's32[1]{0}', space=sflag, size = 0x4, scoped, tag = 'scoped memory for tpu_custom_call.1']
    #allocation5 [shape = 'u8[208896]{0}', space=vmem, size = 0x33000, scoped, tag = 'input window, operand 1, single buffered']
    #allocation6 [shape = 's32[1]{0}', space=sflag, size = 0x4, scoped, tag = 'scoped memory for tpu_custom_call.1']
    #allocation7 [shape = 'u8[196608]{0}', space=vmem, size = 0x30000, scoped, tag = 'input window, operand 2, single buffered']
    #allocation8 [shape = 'u8[65536]{0}', space=vmem, size = 0x10000, scoped, tag = 'input window, operand 3, single buffered']
    #allocation9 [shape = 's32[1]{0}', space=sflag, size = 0x4, scoped, tag = 'scoped memory for tpu_custom_call.1']
    #allocation10 [shape = 'u8[32768]{0}', space=vmem, size = 0x8000, scoped, tag = 'input window, operand 4, single buffered']
    #allocation11 [shape = 'u8[12288]{0}', space=vmem, size = 0x3000, scoped, tag = 'input window, operand 5, single buffered']
    #allocation12 [shape = 's32[1]{0}', space=sflag, size = 0x4, scoped, tag = 'scoped memory for tpu_custom_call.1']
    #allocation13 [shape = 'u8[4096]{0}', space=vmem, size = 0x1000, scoped, tag = 'output window, operand 0, single buffered']
    %11 = vsyncpa [#allocation3], 0
    %12 = vsyncpa [#allocation6], 0
    %13 = vsyncpa [#allocation9], 0
    %14 = vsyncpa [#allocation12], 0
    %15 = vsyncpa [#allocation4], 0
    // Predicated region
    $region2: #{tpu_custom_call.1} parent=1 // pred_check
      _
    $region3: #{tpu_custom_call.1} parent=1 // pred_check_branch
      %17 = sbr.rel (0) target = $region5
    $region4: #{tpu_custom_call.1} parent=1 // pred_region
      %19 = vsyncadd [#allocation3], 0
      %s20 = sshll.u32 %s0, 4
      %s21 = int_to_ptr.hbm [resolvable:$true] %s20
      %s22 = sshll.u32 [#allocation2], 4
      %s23 = int_to_ptr.vmem [resolvable:$true] %s22
      %28 = dma.hbm_to_vmem [thread:$0]  %s21, 768, %s23, [#allocation3], 384, 384, 24
    $region5: #{tpu_custom_call.1} parent=1 // pred_fallthru
      _
    // Predicated region
    $region6: #{tpu_custom_call.1} parent=1 // pred_check
      _
    $region7: #{tpu_custom_call.1} parent=1 // pred_check_branch
      %30 = sbr.rel (0) target = $region9
    $region8: #{tpu_custom_call.1} parent=1 // pred_region
      %32 = vsyncadd [#allocation6], 0
      %s33 = sshll.u32 %s1, 4
      %s34 = int_to_ptr.hbm [resolvable:$true] %s33
      %s35 = sshll.u32 [#allocation5], 4
      %s36 = int_to_ptr.vmem [resolvable:$true] %s35
      %41 = dma.hbm_to_vmem [thread:$0]  %s34, 6528, %s36, [#allocation6], 192, 192, 12
    $region9: #{tpu_custom_call.1} parent=1 // pred_fallthru
      _
    // Predicated region
    $region10: #{tpu_custom_call.1} parent=1 // pred_check
      _
    $region11: #{tpu_custom_call.1} parent=1 // pred_check_branch
      %43 = sbr.rel (0) target = $region13
    $region12: #{tpu_custom_call.1} parent=1 // pred_region
      %45 = vsyncadd [#allocation6], 0
      %s46 = sshll.u32 %s2, 4
      %s47 = int_to_ptr.hbm [resolvable:$true] %s46
      %s48 = sshll.u32 [#allocation7], 4
      %s49 = int_to_ptr.vmem [resolvable:$true] %s48
      %54 = dma.hbm_to_vmem [thread:$0]  %s47, 6144, %s49, [#allocation6], 128, 128, 8
    $region13: #{tpu_custom_call.1} parent=1 // pred_fallthru
      _
    // Predicated region
    $region14: #{tpu_custom_call.1} parent=1 // pred_check
      _
    $region15: #{tpu_custom_call.1} parent=1 // pred_check_branch
      %56 = sbr.rel (0) target = $region17
    $region16: #{tpu_custom_call.1} parent=1 // pred_region
      %58 = vsyncadd [#allocation9], 0
      %s59 = sshll.u32 %s3, 4
      %s60 = int_to_ptr.hbm [resolvable:$true] %s59
      %s61 = sshll.u32 [#allocation8], 4
      %s62 = int_to_ptr.vmem [resolvable:$true] %s61
      %67 = dma.hbm_to_vmem [thread:$0]  %s60, 2048, %s62, [#allocation9], 64, 64, 4
    $region17: #{tpu_custom_call.1} parent=1 // pred_fallthru
      _
    // Predicated region
    $region18: #{tpu_custom_call.1} parent=1 // pred_check
      _
    $region19: #{tpu_custom_call.1} parent=1 // pred_check_branch
      %69 = sbr.rel (0) target = $region21
    $region20: #{tpu_custom_call.1} parent=1 // pred_region
      %71 = vsyncadd [#allocation9], 0
      %s72 = sshll.u32 %s4, 4
      %s73 = int_to_ptr.hbm [resolvable:$true] %s72
      %s74 = sshll.u32 [#allocation10], 4
      %s75 = int_to_ptr.vmem [resolvable:$true] %s74
      %80 = dma.hbm_to_vmem [thread:$0]  %s73, 1024, %s75, [#allocation9], 64, 64, 4
    $region21: #{tpu_custom_call.1} parent=1 // pred_fallthru
      _
    // Predicated region
    $region22: #{tpu_custom_call.1} parent=1 // pred_check
      _
    $region23: #{tpu_custom_call.1} parent=1 // pred_check_branch
      %82 = sbr.rel (0) target = $region25
    $region24: #{tpu_custom_call.1} parent=1 // pred_region
      %84 = vsyncadd [#allocation12], 0
      %s86 = sshll.u32 %s5, 4
      %s87 = int_to_ptr.hbm [resolvable:$true] %s86
      %s88 = sshll.u32 [#allocation11], 4
      %s89 = int_to_ptr.vmem [resolvable:$true] %s88
      %91 = dma.hbm_to_vmem [thread:$0]  %s87, 384, %s89, [#allocation12]
    $region25: #{tpu_custom_call.1} parent=1 // pred_fallthru
      _
    // Predicated region
    $region26: #{tpu_custom_call.1} parent=1 // pred_check
      _
    $region27: #{tpu_custom_call.1} parent=1 // pred_check_branch
      %93 = sbr.rel (0) target = $region29
    $region28: #{tpu_custom_call.1} parent=1 // pred_region
      %95 = dma.done [#allocation3], 768
    $region29: #{tpu_custom_call.1} parent=1 // pred_fallthru
      _
    // Predicated region
    $region30: #{tpu_custom_call.1} parent=1 // pred_check
      _
    $region31: #{tpu_custom_call.1} parent=1 // pred_check_branch
      %97 = sbr.rel (0) target = $region33
    $region32: #{tpu_custom_call.1} parent=1 // pred_region
      %99 = dma.done [#allocation6], 6528
    $region33: #{tpu_custom_call.1} parent=1 // pred_fallthru
      _
    // Predicated region
    $region34: #{tpu_custom_call.1} parent=1 // pred_check
      _
    $region35: #{tpu_custom_call.1} parent=1 // pred_check_branch
      %101 = sbr.rel (0) target = $region37
    $region36: #{tpu_custom_call.1} parent=1 // pred_region
      %103 = dma.done [#allocation6], 6144
    $region37: #{tpu_custom_call.1} parent=1 // pred_fallthru
      _
    // Predicated region
    $region38: #{tpu_custom_call.1} parent=1 // pred_check
      _
    $region39: #{tpu_custom_call.1} parent=1 // pred_check_branch
      %105 = sbr.rel (0) target = $region41
    $region40: #{tpu_custom_call.1} parent=1 // pred_region
      %107 = dma.done [#allocation9], 2048
    $region41: #{tpu_custom_call.1} parent=1 // pred_fallthru
      _
    // Predicated region
    $region42: #{tpu_custom_call.1} parent=1 // pred_check
      _
    $region43: #{tpu_custom_call.1} parent=1 // pred_check_branch
      %109 = sbr.rel (0) target = $region45
    $region44: #{tpu_custom_call.1} parent=1 // pred_region
      %111 = dma.done [#allocation9], 1024
    $region45: #{tpu_custom_call.1} parent=1 // pred_fallthru
      _
    // Predicated region
    $region46: #{tpu_custom_call.1} parent=1 // pred_check
      _
    $region47: #{tpu_custom_call.1} parent=1 // pred_check_branch
      %113 = sbr.rel (0) target = $region49
    $region48: #{tpu_custom_call.1} parent=1 // pred_region
      %115 = dma.done [#allocation12], 384
    $region49: #{tpu_custom_call.1} parent=1 // pred_fallthru
      _
    %v117 = vld [vmem:[#allocation2] sm:$0xff]
    %v118 = vld [vmem:[#allocation2 + $0x8] sm:$0xff]
    %v119 = vld [vmem:[#allocation2 + $0x10] sm:$0xff]
    %v120 = vld [vmem:[#allocation2 + $0x18] sm:$0xff]
    %v121 = vld [vmem:[#allocation2 + $0x20] sm:$0xff]
    %v122 = vld [vmem:[#allocation2 + $0x28] sm:$0xff]
    %v123 = vpack.c.bf16 %v120, %v117
    %v124 = vpack.c.bf16 %v121, %v118
    %v125 = vpack.c.bf16 %v122, %v119
    %v126 = vld [vmem:[#allocation5] sm:$0xff]
    %v127 = vld [vmem:[#allocation5 + $0x8] sm:$0xf]
    %v128 = vld [vmem:[#allocation5 + $0xc] sm:$0xff]
    %v129 = vld [vmem:[#allocation5 + $0x14] sm:$0xf]
    %v130 = vld [vmem:[#allocation5 + $0x18] sm:$0xff]
    %v131 = vld [vmem:[#allocation5 + $0x20] sm:$0xf]
    %v132 = vld [vmem:[#allocation5 + $0x24] sm:$0xff]
    %v133 = vld [vmem:[#allocation5 + $0x2c] sm:$0xf]
    %v134 = vld [vmem:[#allocation5 + $0x30] sm:$0xff]
    %v135 = vld [vmem:[#allocation5 + $0x38] sm:$0xf]
    %v136 = vld [vmem:[#allocation5 + $0x3c] sm:$0xff]
    %v137 = vld [vmem:[#allocation5 + $0x44] sm:$0xf]
    %v138 = vld [vmem:[#allocation5 + $0x48] sm:$0xff]
    %v139 = vld [vmem:[#allocation5 + $0x50] sm:$0xf]
    %v140 = vld [vmem:[#allocation5 + $0x54] sm:$0xff]
    %v141 = vld [vmem:[#allocation5 + $0x5c] sm:$0xf]
    %v142 = vld [vmem:[#allocation5 + $0x60] sm:$0xff]
    %v143 = vld [vmem:[#allocation5 + $0x68] sm:$0xf]
    %v144 = vld [vmem:[#allocation5 + $0x6c] sm:$0xff]
    %v145 = vld [vmem:[#allocation5 + $0x74] sm:$0xf]
    %v146 = vld [vmem:[#allocation5 + $0x78] sm:$0xff]
    %v147 = vld [vmem:[#allocation5 + $0x80] sm:$0xf]
    %v148 = vld [vmem:[#allocation5 + $0x84] sm:$0xff]
    %v149 = vld [vmem:[#allocation5 + $0x8c] sm:$0xf]
    %v150 = vld [vmem:[#allocation5 + $0x90] sm:$0xff]
    %v151 = vld [vmem:[#allocation5 + $0x98] sm:$0xf]
    %v152 = vld [vmem:[#allocation5 + $0x9c] sm:$0xff]
    %v153 = vld [vmem:[#allocation5 + $0xa4] sm:$0xf]
    %v154 = vld [vmem:[#allocation5 + $0xa8] sm:$0xff]
    %v155 = vld [vmem:[#allocation5 + $0xb0] sm:$0xf]
    %v156 = vld [vmem:[#allocation5 + $0xb4] sm:$0xff]
    %v157 = vld [vmem:[#allocation5 + $0xbc] sm:$0xf]
    %v158 = vld [vmem:[#allocation5 + $0xc0] sm:$0xff]
    %v159 = vld [vmem:[#allocation5 + $0xc8] sm:$0xf]
    %v160 = vld [vmem:[#allocation5 + $0xcc] sm:$0xff]
    %v161 = vld [vmem:[#allocation5 + $0xd4] sm:$0xf]
    %v162 = vld [vmem:[#allocation5 + $0xd8] sm:$0xff]
    %v163 = vld [vmem:[#allocation5 + $0xe0] sm:$0xf]
    %v164 = vld [vmem:[#allocation5 + $0xe4] sm:$0xff]
    %v165 = vld [vmem:[#allocation5 + $0xec] sm:$0xf]
    %v166 = vld [vmem:[#allocation5 + $0xf0] sm:$0xff]
    %v167 = vld [vmem:[#allocation5 + $0xf8] sm:$0xf]
    %v168 = vld [vmem:[#allocation5 + $0xfc] sm:$0xff]
    %v169 = vld [vmem:[#allocation5 + $0x104] sm:$0xf]
    %v170 = vld [vmem:[#allocation5 + $0x108] sm:$0xff]
    %v171 = vld [vmem:[#allocation5 + $0x110] sm:$0xf]
    %v172 = vld [vmem:[#allocation5 + $0x114] sm:$0xff]
    %v173 = vld [vmem:[#allocation5 + $0x11c] sm:$0xf]
    %v174 = vld [vmem:[#allocation5 + $0x120] sm:$0xff]
    %v175 = vld [vmem:[#allocation5 + $0x128] sm:$0xf]
    %v176 = vld [vmem:[#allocation5 + $0x12c] sm:$0xff]
    %v177 = vld [vmem:[#allocation5 + $0x134] sm:$0xf]
    %v178 = vld [vmem:[#allocation5 + $0x138] sm:$0xff]
    %v179 = vld [vmem:[#allocation5 + $0x140] sm:$0xf]
    %v180 = vld [vmem:[#allocation5 + $0x144] sm:$0xff]
    %v181 = vld [vmem:[#allocation5 + $0x14c] sm:$0xf]
    %v182 = vld [vmem:[#allocation5 + $0x150] sm:$0xff]
    %v183 = vld [vmem:[#allocation5 + $0x158] sm:$0xf]
    %v184 = vld [vmem:[#allocation5 + $0x15c] sm:$0xff]
    %v185 = vld [vmem:[#allocation5 + $0x164] sm:$0xf]
    %v186 = vld [vmem:[#allocation5 + $0x168] sm:$0xff]
    %v187 = vld [vmem:[#allocation5 + $0x170] sm:$0xf]
    %v188 = vld [vmem:[#allocation5 + $0x174] sm:$0xff]
    %v189 = vld [vmem:[#allocation5 + $0x17c] sm:$0xf]
    %v190 = vld [vmem:[#allocation5 + $0x180] sm:$0xff]
    %v191 = vld [vmem:[#allocation5 + $0x188] sm:$0xf]
    %v192 = vld [vmem:[#allocation5 + $0x18c] sm:$0x77]
    %v193 = vld [vmem:[#allocation5 + $0x194] sm:$0x7]
    %v194 = vld [vmem:[#allocation11] ss:$8 sm:$0x7]
    %v196 = vperm.slane %v194, 0
    %v197 = vperm.slane %v194, 1
    %v198 = vperm.slane %v194, 2
    %v270 = vunpack.c.l.b16 %v126
    %v271 = vunpack.c.h.b16 %v126
    %v272 = vunpack.c.l.b16 %v127
    %v273 = vunpack.c.l.b16 %v128
    %v274 = vunpack.c.h.b16 %v128
    %v275 = vunpack.c.l.b16 %v129
    %v276 = vunpack.c.l.b16 %v130
    %v277 = vunpack.c.h.b16 %v130
    %v278 = vunpack.c.l.b16 %v131
    %v279 = vunpack.c.l.b16 %v132
    %v280 = vunpack.c.h.b16 %v132
    %v281 = vunpack.c.l.b16 %v133
    %v282 = vunpack.c.l.b16 %v134
    %v283 = vunpack.c.h.b16 %v134
    %v284 = vunpack.c.l.b16 %v135
    %v285 = vunpack.c.l.b16 %v136
    %v286 = vunpack.c.h.b16 %v136
    %v287 = vunpack.c.l.b16 %v137
    %v288 = vunpack.c.l.b16 %v138
    %v289 = vunpack.c.h.b16 %v138
    %v290 = vunpack.c.l.b16 %v139
    %v291 = vunpack.c.l.b16 %v140
    %v292 = vunpack.c.h.b16 %v140
    %v293 = vunpack.c.l.b16 %v141
    %v294 = vunpack.c.l.b16 %v142
    %v295 = vunpack.c.h.b16 %v142
    %v296 = vunpack.c.l.b16 %v143
    %v297 = vunpack.c.l.b16 %v144
    %v298 = vunpack.c.h.b16 %v144
    %v299 = vunpack.c.l.b16 %v145
    %v300 = vunpack.c.l.b16 %v146
    %v301 = vunpack.c.h.b16 %v146
    %v302 = vunpack.c.l.b16 %v147
    %v303 = vunpack.c.l.b16 %v148
    %v304 = vunpack.c.h.b16 %v148
    %v305 = vunpack.c.l.b16 %v149
    %v306 = vunpack.c.l.b16 %v150
    %v307 = vunpack.c.h.b16 %v150
    %v308 = vunpack.c.l.b16 %v151
    %v309 = vunpack.c.l.b16 %v152
    %v310 = vunpack.c.h.b16 %v152
    %v311 = vunpack.c.l.b16 %v153
    %v312 = vunpack.c.l.b16 %v154
    %v313 = vunpack.c.h.b16 %v154
    %v314 = vunpack.c.l.b16 %v155
    %v315 = vunpack.c.l.b16 %v156
    %v316 = vunpack.c.h.b16 %v156
    %v317 = vunpack.c.l.b16 %v157
    %v318 = vunpack.c.l.b16 %v158
    %v319 = vunpack.c.h.b16 %v158
    %v320 = vunpack.c.l.b16 %v159
    %v321 = vunpack.c.l.b16 %v160
    %v322 = vunpack.c.h.b16 %v160
    %v323 = vunpack.c.l.b16 %v161
    %v324 = vunpack.c.l.b16 %v162
    %v325 = vunpack.c.h.b16 %v162
    %v326 = vunpack.c.l.b16 %v163
    %v327 = vunpack.c.l.b16 %v164
    %v328 = vunpack.c.h.b16 %v164
    %v329 = vunpack.c.l.b16 %v165
    %v330 = vunpack.c.l.b16 %v166
    %v331 = vunpack.c.h.b16 %v166
    %v332 = vunpack.c.l.b16 %v167
    %v333 = vunpack.c.l.b16 %v168
    %v334 = vunpack.c.h.b16 %v168
    %v335 = vunpack.c.l.b16 %v169
    %v336 = vunpack.c.l.b16 %v170
    %v337 = vunpack.c.h.b16 %v170
    %v338 = vunpack.c.l.b16 %v171
    %v339 = vunpack.c.l.b16 %v172
    %v340 = vunpack.c.h.b16 %v172
    %v341 = vunpack.c.l.b16 %v173
    %v342 = vunpack.c.l.b16 %v174
    %v343 = vunpack.c.h.b16 %v174
    %v344 = vunpack.c.l.b16 %v175
    %v345 = vunpack.c.l.b16 %v176
    %v346 = vunpack.c.h.b16 %v176
    %v347 = vunpack.c.l.b16 %v177
    %v348 = vunpack.c.l.b16 %v178
    %v349 = vunpack.c.h.b16 %v178
    %v350 = vunpack.c.l.b16 %v179
    %v351 = vunpack.c.l.b16 %v180
    %v352 = vunpack.c.h.b16 %v180
    %v353 = vunpack.c.l.b16 %v181
    %v354 = vunpack.c.l.b16 %v182
    %v355 = vunpack.c.h.b16 %v182
    %v356 = vunpack.c.l.b16 %v183
    %v357 = vunpack.c.l.b16 %v184
    %v358 = vunpack.c.h.b16 %v184
    %v359 = vunpack.c.l.b16 %v185
    %v360 = vunpack.c.l.b16 %v186
    %v361 = vunpack.c.h.b16 %v186
    %v362 = vunpack.c.l.b16 %v187
    %v363 = vunpack.c.l.b16 %v188
    %v364 = vunpack.c.h.b16 %v188
    %v365 = vunpack.c.l.b16 %v189
    %v366 = vunpack.c.l.b16 %v190
    %v367 = vunpack.c.h.b16 %v190
    %v368 = vunpack.c.l.b16 %v191
    %v369 = vunpack.c.l.b16 %v192
    %v370 = vunpack.c.h.b16 %v192
    %v371 = vunpack.c.l.b16 %v193
    %v372 = vpack.c.b16 %v273, %v270
    %v373 = vpack.c.b16 %v274, %v271
    %v374 = vpack.c.b16 %v275, %v272
    %v375 = vpack.c.b16 %v279, %v276
    %v376 = vpack.c.b16 %v280, %v277
    %v377 = vpack.c.b16 %v281, %v278
    %v378 = vpack.c.b16 %v285, %v282
    %v379 = vpack.c.b16 %v286, %v283
    %v380 = vpack.c.b16 %v287, %v284
    %v381 = vpack.c.b16 %v291, %v288
    %v382 = vpack.c.b16 %v292, %v289
    %v383 = vpack.c.b16 %v293, %v290
    %v384 = vpack.c.b16 %v297, %v294
    %v385 = vpack.c.b16 %v298, %v295
    %v386 = vpack.c.b16 %v299, %v296
    %v387 = vpack.c.b16 %v303, %v300
    %v388 = vpack.c.b16 %v304, %v301
    %v389 = vpack.c.b16 %v305, %v302
    %v390 = vpack.c.b16 %v309, %v306
    %v391 = vpack.c.b16 %v310, %v307
    %v392 = vpack.c.b16 %v311, %v308
    %v393 = vpack.c.b16 %v315, %v312
    %v394 = vpack.c.b16 %v316, %v313
    %v395 = vpack.c.b16 %v317, %v314
    %v396 = vpack.c.b16 %v321, %v318
    %v397 = vpack.c.b16 %v322, %v319
    %v398 = vpack.c.b16 %v323, %v320
    %v399 = vpack.c.b16 %v327, %v324
    %v400 = vpack.c.b16 %v328, %v325
    %v401 = vpack.c.b16 %v329, %v326
    %v402 = vpack.c.b16 %v333, %v330
    %v403 = vpack.c.b16 %v334, %v331
    %v404 = vpack.c.b16 %v335, %v332
    %v405 = vpack.c.b16 %v339, %v336
    %v406 = vpack.c.b16 %v340, %v337
    %v407 = vpack.c.b16 %v341, %v338
    %v408 = vpack.c.b16 %v345, %v342
    %v409 = vpack.c.b16 %v346, %v343
    %v410 = vpack.c.b16 %v347, %v344
    %v411 = vpack.c.b16 %v351, %v348
    %v412 = vpack.c.b16 %v352, %v349
    %v413 = vpack.c.b16 %v353, %v350
    %v414 = vpack.c.b16 %v357, %v354
    %v415 = vpack.c.b16 %v358, %v355
    %v416 = vpack.c.b16 %v359, %v356
    %v417 = vpack.c.b16 %v363, %v360
    %v418 = vpack.c.b16 %v364, %v361
    %v419 = vpack.c.b16 %v365, %v362
    %v420 = vpack.c.b16 %v369, %v366
    %v421 = vpack.c.b16 %v370, %v367
    %v422 = vpack.c.b16 %v371, %v368
    %vm471 = vcmask 113664
    %v473 = vsel %vm471, %v125, 0
    %vm475 = vcmask 1046528
    %v477 = vsel %vm475, %v420, 0
    %v480 = vsel %vm475, %v421, 0
    %v483 = vsel %vm475, %v422, 0
    %485 = vmatpush.bf16.msra.mxu0 %v393
    %486 = vmatpush.bf16.msra.mxu0 %v390
    %487 = vmatpush.bf16.msra.mxu0 %v387
    %488 = vmatpush.bf16.msra.mxu0 %v384
    %489 = vmatpush.bf16.msra.mxu0 %v381
    %490 = vmatpush.bf16.msra.mxu0 %v378
    %491 = vmatpush.bf16.msra.mxu0 %v375
    %492 = vmatpush.bf16.msra.mxu0 %v372
    %493 = vmatmul.bf16.gmra.mxu0 %v123
    %v494 = vpop.f32.mrf.mxu0
    %v495 = vadd.f32 %v196, %v494
    %v496 = vpop.f32.mrf.mxu0
    %v497 = vadd.f32 %v196, %v496
    %498 = vdwg.mxu0
    %499 = vmatpush.bf16.msra.mxu0 %v417
    %500 = vmatpush.bf16.msra.mxu0 %v414
    %501 = vmatpush.bf16.msra.mxu0 %v411
    %502 = vmatpush.bf16.msra.mxu0 %v408
    %503 = vmatpush.bf16.msra.mxu0 %v405
    %504 = vmatpush.bf16.msra.mxu0 %v402
    %505 = vmatpush.bf16.msra.mxu0 %v399
    %506 = vmatpush.bf16.msra.mxu0 %v396
    %507 = vmatmul.bf16.gmra.mxu0 %v124
    %v508 = vpop.f32.mrf.mxu0
    %v509 = vadd.f32 %v495, %v508
    %v510 = vpop.f32.mrf.mxu0
    %v511 = vadd.f32 %v497, %v510
    %512 = vdwg.mxu0
    %513 = vmatpush.bf16.msra.mxu0 0
    %514 = vmatpush.bf16.msra.mxu0 0
    %515 = vmatpush.bf16.msra.mxu0 0
    %516 = vmatpush.bf16.msra.mxu0 0
    %517 = vmatpush.bf16.msra.mxu0 0
    %518 = vmatpush.bf16.msra.mxu0 0
    %519 = vmatpush.bf16.msra.mxu0 0
    %520 = vmatpush.bf16.msra.mxu0 %v477
    %521 = vmatmul.bf16.gmra.mxu0 %v473
    %v522 = vpop.f32.mrf.mxu0
    %v523 = vadd.f32 %v509, %v522
    %v524 = vpop.f32.mrf.mxu0
    %v525 = vadd.f32 %v511, %v524
    %526 = vdwg.mxu0
    %527 = vmatpush.bf16.msra.mxu0 %v394
    %528 = vmatpush.bf16.msra.mxu0 %v391
    %529 = vmatpush.bf16.msra.mxu0 %v388
    %530 = vmatpush.bf16.msra.mxu0 %v385
    %531 = vmatpush.bf16.msra.mxu0 %v382
    %532 = vmatpush.bf16.msra.mxu0 %v379
    %533 = vmatpush.bf16.msra.mxu0 %v376
    %534 = vmatpush.bf16.msra.mxu0 %v373
    %535 = vmatmul.bf16.gmra.mxu0 %v123
    %v536 = vpop.f32.mrf.mxu0
    %v537 = vadd.f32 %v197, %v536
    %v538 = vpop.f32.mrf.mxu0
    %v539 = vadd.f32 %v197, %v538
    %540 = vdwg.mxu0
    %541 = vmatpush.bf16.msra.mxu0 %v418
    %542 = vmatpush.bf16.msra.mxu0 %v415
    %543 = vmatpush.bf16.msra.mxu0 %v412
    %544 = vmatpush.bf16.msra.mxu0 %v409
    %545 = vmatpush.bf16.msra.mxu0 %v406
    %546 = vmatpush.bf16.msra.mxu0 %v403
    %547 = vmatpush.bf16.msra.mxu0 %v400
    %548 = vmatpush.bf16.msra.mxu0 %v397
    %549 = vmatmul.bf16.gmra.mxu0 %v124
    %v550 = vpop.f32.mrf.mxu0
    %v551 = vadd.f32 %v537, %v550
    %v552 = vpop.f32.mrf.mxu0
    %v553 = vadd.f32 %v539, %v552
    %554 = vdwg.mxu0
    %555 = vmatpush.bf16.msra.mxu0 0
    %556 = vmatpush.bf16.msra.mxu0 0
    %557 = vmatpush.bf16.msra.mxu0 0
    %558 = vmatpush.bf16.msra.mxu0 0
    %559 = vmatpush.bf16.msra.mxu0 0
    %560 = vmatpush.bf16.msra.mxu0 0
    %561 = vmatpush.bf16.msra.mxu0 0
    %562 = vmatpush.bf16.msra.mxu0 %v480
    %563 = vmatmul.bf16.gmra.mxu0 %v473
    %v564 = vpop.f32.mrf.mxu0
    %v565 = vadd.f32 %v551, %v564
    %v566 = vpop.f32.mrf.mxu0
    %v567 = vadd.f32 %v553, %v566
    %568 = vdwg.mxu0
    %569 = vmatpush.bf16.msra.mxu0 %v395
    %570 = vmatpush.bf16.msra.mxu0 %v392
    %571 = vmatpush.bf16.msra.mxu0 %v389
    %572 = vmatpush.bf16.msra.mxu0 %v386
    %573 = vmatpush.bf16.msra.mxu0 %v383
    %574 = vmatpush.bf16.msra.mxu0 %v380
    %575 = vmatpush.bf16.msra.mxu0 %v377
    %576 = vmatpush.bf16.msra.mxu0 %v374
    %577 = vmatmul.bf16.gmra.mxu0 %v123
    %v578 = vpop.f32.mrf.mxu0
    %v579 = vadd.f32 %v198, %v578
    %v580 = vpop.f32.mrf.mxu0
    %v581 = vadd.f32 %v198, %v580
    %582 = vdwg.mxu0
    %583 = vmatpush.bf16.msra.mxu0 %v419
    %584 = vmatpush.bf16.msra.mxu0 %v416
    %585 = vmatpush.bf16.msra.mxu0 %v413
    %586 = vmatpush.bf16.msra.mxu0 %v410
    %587 = vmatpush.bf16.msra.mxu0 %v407
    %588 = vmatpush.bf16.msra.mxu0 %v404
    %589 = vmatpush.bf16.msra.mxu0 %v401
    %590 = vmatpush.bf16.msra.mxu0 %v398
    %591 = vmatmul.bf16.gmra.mxu0 %v124
    %v592 = vpop.f32.mrf.mxu0
    %v593 = vadd.f32 %v579, %v592
    %v594 = vpop.f32.mrf.mxu0
    %v595 = vadd.f32 %v581, %v594
    %596 = vdwg.mxu0
    %597 = vmatpush.bf16.msra.mxu0 0
    %598 = vmatpush.bf16.msra.mxu0 0
    %599 = vmatpush.bf16.msra.mxu0 0
    %600 = vmatpush.bf16.msra.mxu0 0
    %601 = vmatpush.bf16.msra.mxu0 0
    %602 = vmatpush.bf16.msra.mxu0 0
    %603 = vmatpush.bf16.msra.mxu0 0
    %604 = vmatpush.bf16.msra.mxu0 %v483
    %605 = vmatmul.bf16.gmra.mxu0 %v473
    %v606 = vpop.f32.mrf.mxu0
    %v607 = vadd.f32 %v593, %v606
    %v608 = vpop.f32.mrf.mxu0
    %v609 = vadd.f32 %v595, %v608
    %610 = vdwg.mxu0
    %v611 = vmax.f32 %v523, 0.0
    %v612 = vmax.f32 %v565, 0.0
    %v613 = vmax.f32 %v607, 0.0
    %v614 = vmax.f32 %v525, 0.0
    %v615 = vmax.f32 %v567, 0.0
    %v616 = vmax.f32 %v609, 0.0
    %v617 = vpack.c.bf16 %v614, %v611
    %v618 = vpack.c.bf16 %v615, %v612
    %v619 = vpack.c.bf16 %v616, %v613
    %v620 = vld [vmem:[#allocation7] sm:$0xff]
    %v621 = vld [vmem:[#allocation7 + $0x8] sm:$0xff]
    %v622 = vld [vmem:[#allocation7 + $0x10] sm:$0xff]
    %v623 = vld [vmem:[#allocation7 + $0x18] sm:$0xff]
    %v624 = vld [vmem:[#allocation7 + $0x20] sm:$0xff]
    %v625 = vld [vmem:[#allocation7 + $0x28] sm:$0xff]
    %v626 = vld [vmem:[#allocation7 + $0x30] sm:$0xff]
    %v627 = vld [vmem:[#allocation7 + $0x38] sm:$0xff]
    %v628 = vld [vmem:[#allocation7 + $0x40] sm:$0xff]
    %v629 = vld [vmem:[#allocation7 + $0x48] sm:$0xff]
    %v630 = vld [vmem:[#allocation7 + $0x50] sm:$0xff]
    %v631 = vld [vmem:[#allocation7 + $0x58] sm:$0xff]
    %v632 = vld [vmem:[#allocation7 + $0x60] sm:$0xff]
    %v633 = vld [vmem:[#allocation7 + $0x68] sm:$0xff]
    %v634 = vld [vmem:[#allocation7 + $0x70] sm:$0xff]
    %v635 = vld [vmem:[#allocation7 + $0x78] sm:$0xff]
    %v636 = vld [vmem:[#allocation7 + $0x80] sm:$0xff]
    %v637 = vld [vmem:[#allocation7 + $0x88] sm:$0xff]
    %v638 = vld [vmem:[#allocation7 + $0x90] sm:$0xff]
    %v639 = vld [vmem:[#allocation7 + $0x98] sm:$0xff]
    %v640 = vld [vmem:[#allocation7 + $0xa0] sm:$0xff]
    %v641 = vld [vmem:[#allocation7 + $0xa8] sm:$0xff]
    %v642 = vld [vmem:[#allocation7 + $0xb0] sm:$0xff]
    %v643 = vld [vmem:[#allocation7 + $0xb8] sm:$0xff]
    %v644 = vld [vmem:[#allocation7 + $0xc0] sm:$0xff]
    %v645 = vld [vmem:[#allocation7 + $0xc8] sm:$0xff]
    %v646 = vld [vmem:[#allocation7 + $0xd0] sm:$0xff]
    %v647 = vld [vmem:[#allocation7 + $0xd8] sm:$0xff]
    %v648 = vld [vmem:[#allocation7 + $0xe0] sm:$0xff]
    %v649 = vld [vmem:[#allocation7 + $0xe8] sm:$0xff]
    %v650 = vld [vmem:[#allocation7 + $0xf0] sm:$0xff]
    %v651 = vld [vmem:[#allocation7 + $0xf8] sm:$0xff]
    %v652 = vld [vmem:[#allocation7 + $0x100] sm:$0xff]
    %v653 = vld [vmem:[#allocation7 + $0x108] sm:$0xff]
    %v654 = vld [vmem:[#allocation7 + $0x110] sm:$0xff]
    %v655 = vld [vmem:[#allocation7 + $0x118] sm:$0xff]
    %v656 = vld [vmem:[#allocation7 + $0x120] sm:$0xff]
    %v657 = vld [vmem:[#allocation7 + $0x128] sm:$0xff]
    %v658 = vld [vmem:[#allocation7 + $0x130] sm:$0xff]
    %v659 = vld [vmem:[#allocation7 + $0x138] sm:$0xff]
    %v660 = vld [vmem:[#allocation7 + $0x140] sm:$0xff]
    %v661 = vld [vmem:[#allocation7 + $0x148] sm:$0xff]
    %v662 = vld [vmem:[#allocation7 + $0x150] sm:$0xff]
    %v663 = vld [vmem:[#allocation7 + $0x158] sm:$0xff]
    %v664 = vld [vmem:[#allocation7 + $0x160] sm:$0xff]
    %v665 = vld [vmem:[#allocation7 + $0x168] sm:$0xff]
    %v666 = vld [vmem:[#allocation7 + $0x170] sm:$0xff]
    %v667 = vld [vmem:[#allocation7 + $0x178] sm:$0xff]
    %s668 = scalar_lea.vmem [#allocation11], 1
    %v669 = vld [vmem:[%s668] ss:$8 sm:$0x3]
    %v671 = vperm.slane %v669, 0
    %v672 = vperm.slane %v669, 1
    %v723 = vunpack.c.l.b16 %v620
    %v724 = vunpack.c.h.b16 %v620
    %v725 = vunpack.c.l.b16 %v621
    %v726 = vunpack.c.h.b16 %v621
    %v727 = vunpack.c.l.b16 %v622
    %v728 = vunpack.c.h.b16 %v622
    %v729 = vunpack.c.l.b16 %v623
    %v730 = vunpack.c.h.b16 %v623
    %v731 = vunpack.c.l.b16 %v624
    %v732 = vunpack.c.h.b16 %v624
    %v733 = vunpack.c.l.b16 %v625
    %v734 = vunpack.c.h.b16 %v625
    %v735 = vunpack.c.l.b16 %v626
    %v736 = vunpack.c.h.b16 %v626
    %v737 = vunpack.c.l.b16 %v627
    %v738 = vunpack.c.h.b16 %v627
    %v739 = vunpack.c.l.b16 %v628
    %v740 = vunpack.c.h.b16 %v628
    %v741 = vunpack.c.l.b16 %v629
    %v742 = vunpack.c.h.b16 %v629
    %v743 = vunpack.c.l.b16 %v630
    %v744 = vunpack.c.h.b16 %v630
    %v745 = vunpack.c.l.b16 %v631
    %v746 = vunpack.c.h.b16 %v631
    %v747 = vunpack.c.l.b16 %v632
    %v748 = vunpack.c.h.b16 %v632
    %v749 = vunpack.c.l.b16 %v633
    %v750 = vunpack.c.h.b16 %v633
    %v751 = vunpack.c.l.b16 %v634
    %v752 = vunpack.c.h.b16 %v634
    %v753 = vunpack.c.l.b16 %v635
    %v754 = vunpack.c.h.b16 %v635
    %v755 = vunpack.c.l.b16 %v636
    %v756 = vunpack.c.h.b16 %v636
    %v757 = vunpack.c.l.b16 %v637
    %v758 = vunpack.c.h.b16 %v637
    %v759 = vunpack.c.l.b16 %v638
    %v760 = vunpack.c.h.b16 %v638
    %v761 = vunpack.c.l.b16 %v639
    %v762 = vunpack.c.h.b16 %v639
    %v763 = vunpack.c.l.b16 %v640
    %v764 = vunpack.c.h.b16 %v640
    %v765 = vunpack.c.l.b16 %v641
    %v766 = vunpack.c.h.b16 %v641
    %v767 = vunpack.c.l.b16 %v642
    %v768 = vunpack.c.h.b16 %v642
    %v769 = vunpack.c.l.b16 %v643
    %v770 = vunpack.c.h.b16 %v643
    %v771 = vunpack.c.l.b16 %v644
    %v772 = vunpack.c.h.b16 %v644
    %v773 = vunpack.c.l.b16 %v645
    %v774 = vunpack.c.h.b16 %v645
    %v775 = vunpack.c.l.b16 %v646
    %v776 = vunpack.c.h.b16 %v646
    %v777 = vunpack.c.l.b16 %v647
    %v778 = vunpack.c.h.b16 %v647
    %v779 = vunpack.c.l.b16 %v648
    %v780 = vunpack.c.h.b16 %v648
    %v781 = vunpack.c.l.b16 %v649
    %v782 = vunpack.c.h.b16 %v649
    %v783 = vunpack.c.l.b16 %v650
    %v784 = vunpack.c.h.b16 %v650
    %v785 = vunpack.c.l.b16 %v651
    %v786 = vunpack.c.h.b16 %v651
    %v787 = vunpack.c.l.b16 %v652
    %v788 = vunpack.c.h.b16 %v652
    %v789 = vunpack.c.l.b16 %v653
    %v790 = vunpack.c.h.b16 %v653
    %v791 = vunpack.c.l.b16 %v654
    %v792 = vunpack.c.h.b16 %v654
    %v793 = vunpack.c.l.b16 %v655
    %v794 = vunpack.c.h.b16 %v655
    %v795 = vunpack.c.l.b16 %v656
    %v796 = vunpack.c.h.b16 %v656
    %v797 = vunpack.c.l.b16 %v657
    %v798 = vunpack.c.h.b16 %v657
    %v799 = vunpack.c.l.b16 %v658
    %v800 = vunpack.c.h.b16 %v658
    %v801 = vunpack.c.l.b16 %v659
    %v802 = vunpack.c.h.b16 %v659
    %v803 = vunpack.c.l.b16 %v660
    %v804 = vunpack.c.h.b16 %v660
    %v805 = vunpack.c.l.b16 %v661
    %v806 = vunpack.c.h.b16 %v661
    %v807 = vunpack.c.l.b16 %v662
    %v808 = vunpack.c.h.b16 %v662
    %v809 = vunpack.c.l.b16 %v663
    %v810 = vunpack.c.h.b16 %v663
    %v811 = vunpack.c.l.b16 %v664
    %v812 = vunpack.c.h.b16 %v664
    %v813 = vunpack.c.l.b16 %v665
    %v814 = vunpack.c.h.b16 %v665
    %v815 = vunpack.c.l.b16 %v666
    %v816 = vunpack.c.h.b16 %v666
    %v817 = vunpack.c.l.b16 %v667
    %v818 = vunpack.c.h.b16 %v667
    %v819 = vpack.c.b16 %v725, %v723
    %v820 = vpack.c.b16 %v726, %v724
    %v821 = vpack.c.b16 %v729, %v727
    %v822 = vpack.c.b16 %v730, %v728
    %v823 = vpack.c.b16 %v733, %v731
    %v824 = vpack.c.b16 %v734, %v732
    %v825 = vpack.c.b16 %v737, %v735
    %v826 = vpack.c.b16 %v738, %v736
    %v827 = vpack.c.b16 %v741, %v739
    %v828 = vpack.c.b16 %v742, %v740
    %v829 = vpack.c.b16 %v745, %v743
    %v830 = vpack.c.b16 %v746, %v744
    %v831 = vpack.c.b16 %v749, %v747
    %v832 = vpack.c.b16 %v750, %v748
    %v833 = vpack.c.b16 %v753, %v751
    %v834 = vpack.c.b16 %v754, %v752
    %v835 = vpack.c.b16 %v757, %v755
    %v836 = vpack.c.b16 %v758, %v756
    %v837 = vpack.c.b16 %v761, %v759
    %v838 = vpack.c.b16 %v762, %v760
    %v839 = vpack.c.b16 %v765, %v763
    %v840 = vpack.c.b16 %v766, %v764
    %v841 = vpack.c.b16 %v769, %v767
    %v842 = vpack.c.b16 %v770, %v768
    %v843 = vpack.c.b16 %v773, %v771
    %v844 = vpack.c.b16 %v774, %v772
    %v845 = vpack.c.b16 %v777, %v775
    %v846 = vpack.c.b16 %v778, %v776
    %v847 = vpack.c.b16 %v781, %v779
    %v848 = vpack.c.b16 %v782, %v780
    %v849 = vpack.c.b16 %v785, %v783
    %v850 = vpack.c.b16 %v786, %v784
    %v851 = vpack.c.b16 %v789, %v787
    %v852 = vpack.c.b16 %v790, %v788
    %v853 = vpack.c.b16 %v793, %v791
    %v854 = vpack.c.b16 %v794, %v792
    %v855 = vpack.c.b16 %v797, %v795
    %v856 = vpack.c.b16 %v798, %v796
    %v857 = vpack.c.b16 %v801, %v799
    %v858 = vpack.c.b16 %v802, %v800
    %v859 = vpack.c.b16 %v805, %v803
    %v860 = vpack.c.b16 %v806, %v804
    %v861 = vpack.c.b16 %v809, %v807
    %v862 = vpack.c.b16 %v810, %v808
    %v863 = vpack.c.b16 %v813, %v811
    %v864 = vpack.c.b16 %v814, %v812
    %v865 = vpack.c.b16 %v817, %v815
    %v866 = vpack.c.b16 %v818, %v816
    %915 = vmatpush.bf16.msra.mxu0 %v833
    %916 = vmatpush.bf16.msra.mxu0 %v831
    %917 = vmatpush.bf16.msra.mxu0 %v829
    %918 = vmatpush.bf16.msra.mxu0 %v827
    %919 = vmatpush.bf16.msra.mxu0 %v825
    %920 = vmatpush.bf16.msra.mxu0 %v823
    %921 = vmatpush.bf16.msra.mxu0 %v821
    %922 = vmatpush.bf16.msra.mxu0 %v819
    %923 = vmatmul.bf16.gmra.mxu0 %v617
    %v924 = vpop.f32.mrf.mxu0
    %v925 = vadd.f32 %v671, %v924
    %v926 = vpop.f32.mrf.mxu0
    %v927 = vadd.f32 %v671, %v926
    %928 = vdwg.mxu0
    %929 = vmatpush.bf16.msra.mxu0 %v849
    %930 = vmatpush.bf16.msra.mxu0 %v847
    %931 = vmatpush.bf16.msra.mxu0 %v845
    %932 = vmatpush.bf16.msra.mxu0 %v843
    %933 = vmatpush.bf16.msra.mxu0 %v841
    %934 = vmatpush.bf16.msra.mxu0 %v839
    %935 = vmatpush.bf16.msra.mxu0 %v837
    %936 = vmatpush.bf16.msra.mxu0 %v835
    %937 = vmatmul.bf16.gmra.mxu0 %v618
    %v938 = vpop.f32.mrf.mxu0
    %v939 = vadd.f32 %v925, %v938
    %v940 = vpop.f32.mrf.mxu0
    %v941 = vadd.f32 %v927, %v940
    %942 = vdwg.mxu0
    %943 = vmatpush.bf16.msra.mxu0 %v865
    %944 = vmatpush.bf16.msra.mxu0 %v863
    %945 = vmatpush.bf16.msra.mxu0 %v861
    %946 = vmatpush.bf16.msra.mxu0 %v859
    %947 = vmatpush.bf16.msra.mxu0 %v857
    %948 = vmatpush.bf16.msra.mxu0 %v855
    %949 = vmatpush.bf16.msra.mxu0 %v853
    %950 = vmatpush.bf16.msra.mxu0 %v851
    %951 = vmatmul.bf16.gmra.mxu0 %v619
    %v952 = vpop.f32.mrf.mxu0
    %v953 = vadd.f32 %v939, %v952
    %v954 = vpop.f32.mrf.mxu0
    %v955 = vadd.f32 %v941, %v954
    %956 = vdwg.mxu0
    %957 = vmatpush.bf16.msra.mxu0 %v834
    %958 = vmatpush.bf16.msra.mxu0 %v832
    %959 = vmatpush.bf16.msra.mxu0 %v830
    %960 = vmatpush.bf16.msra.mxu0 %v828
    %961 = vmatpush.bf16.msra.mxu0 %v826
    %962 = vmatpush.bf16.msra.mxu0 %v824
    %963 = vmatpush.bf16.msra.mxu0 %v822
    %964 = vmatpush.bf16.msra.mxu0 %v820
    %965 = vmatmul.bf16.gmra.mxu0 %v617
    %v966 = vpop.f32.mrf.mxu0
    %v967 = vadd.f32 %v672, %v966
    %v968 = vpop.f32.mrf.mxu0
    %v969 = vadd.f32 %v672, %v968
    %970 = vdwg.mxu0
    %971 = vmatpush.bf16.msra.mxu0 %v850
    %972 = vmatpush.bf16.msra.mxu0 %v848
    %973 = vmatpush.bf16.msra.mxu0 %v846
    %974 = vmatpush.bf16.msra.mxu0 %v844
    %975 = vmatpush.bf16.msra.mxu0 %v842
    %976 = vmatpush.bf16.msra.mxu0 %v840
    %977 = vmatpush.bf16.msra.mxu0 %v838
    %978 = vmatpush.bf16.msra.mxu0 %v836
    %979 = vmatmul.bf16.gmra.mxu0 %v618
    %v980 = vpop.f32.mrf.mxu0
    %v981 = vadd.f32 %v967, %v980
    %v982 = vpop.f32.mrf.mxu0
    %v983 = vadd.f32 %v969, %v982
    %984 = vdwg.mxu0
    %985 = vmatpush.bf16.msra.mxu0 %v866
    %986 = vmatpush.bf16.msra.mxu0 %v864
    %987 = vmatpush.bf16.msra.mxu0 %v862
    %988 = vmatpush.bf16.msra.mxu0 %v860
    %989 = vmatpush.bf16.msra.mxu0 %v858
    %990 = vmatpush.bf16.msra.mxu0 %v856
    %991 = vmatpush.bf16.msra.mxu0 %v854
    %992 = vmatpush.bf16.msra.mxu0 %v852
    %993 = vmatmul.bf16.gmra.mxu0 %v619
    %v994 = vpop.f32.mrf.mxu0
    %v995 = vadd.f32 %v981, %v994
    %v996 = vpop.f32.mrf.mxu0
    %v997 = vadd.f32 %v983, %v996
    %998 = vdwg.mxu0
    %v999 = vmax.f32 %v953, 0.0
    %v1000 = vmax.f32 %v995, 0.0
    %v1001 = vmax.f32 %v955, 0.0
    %v1002 = vmax.f32 %v997, 0.0
    %v1003 = vpack.c.bf16 %v1001, %v999
    %v1004 = vpack.c.bf16 %v1002, %v1000
    %v1005 = vld [vmem:[#allocation8] sm:$0xf]
    %v1006 = vld [vmem:[#allocation8 + $0x4] sm:$0xf]
    %v1007 = vld [vmem:[#allocation8 + $0x8] sm:$0xf]
    %v1008 = vld [vmem:[#allocation8 + $0xc] sm:$0xf]
    %v1009 = vld [vmem:[#allocation8 + $0x10] sm:$0xf]
    %v1010 = vld [vmem:[#allocation8 + $0x14] sm:$0xf]
    %v1011 = vld [vmem:[#allocation8 + $0x18] sm:$0xf]
    %v1012 = vld [vmem:[#allocation8 + $0x1c] sm:$0xf]
    %v1013 = vld [vmem:[#allocation8 + $0x20] sm:$0xf]
    %v1014 = vld [vmem:[#allocation8 + $0x24] sm:$0xf]
    %v1015 = vld [vmem:[#allocation8 + $0x28] sm:$0xf]
    %v1016 = vld [vmem:[#allocation8 + $0x2c] sm:$0xf]
    %v1017 = vld [vmem:[#allocation8 + $0x30] sm:$0xf]
    %v1018 = vld [vmem:[#allocation8 + $0x34] sm:$0xf]
    %v1019 = vld [vmem:[#allocation8 + $0x38] sm:$0xf]
    %v1020 = vld [vmem:[#allocation8 + $0x3c] sm:$0xf]
    %v1021 = vld [vmem:[#allocation8 + $0x40] sm:$0xf]
    %v1022 = vld [vmem:[#allocation8 + $0x44] sm:$0xf]
    %v1023 = vld [vmem:[#allocation8 + $0x48] sm:$0xf]
    %v1024 = vld [vmem:[#allocation8 + $0x4c] sm:$0xf]
    %v1025 = vld [vmem:[#allocation8 + $0x50] sm:$0xf]
    %v1026 = vld [vmem:[#allocation8 + $0x54] sm:$0xf]
    %v1027 = vld [vmem:[#allocation8 + $0x58] sm:$0xf]
    %v1028 = vld [vmem:[#allocation8 + $0x5c] sm:$0xf]
    %v1029 = vld [vmem:[#allocation8 + $0x60] sm:$0xf]
    %v1030 = vld [vmem:[#allocation8 + $0x64] sm:$0xf]
    %v1031 = vld [vmem:[#allocation8 + $0x68] sm:$0xf]
    %v1032 = vld [vmem:[#allocation8 + $0x6c] sm:$0xf]
    %v1033 = vld [vmem:[#allocation8 + $0x70] sm:$0xf]
    %v1034 = vld [vmem:[#allocation8 + $0x74] sm:$0xf]
    %v1035 = vld [vmem:[#allocation8 + $0x78] sm:$0xf]
    %v1036 = vld [vmem:[#allocation8 + $0x7c] sm:$0xf]
    %v1037 = vld [vmem:[#allocation11 + $0x2] ss:$0 sm:$0xff]
    %v1070 = vunpack.c.l.b16 %v1005
    %v1071 = vunpack.c.l.b16 %v1006
    %v1072 = vunpack.c.l.b16 %v1007
    %v1073 = vunpack.c.l.b16 %v1008
    %v1074 = vunpack.c.l.b16 %v1009
    %v1075 = vunpack.c.l.b16 %v1010
    %v1076 = vunpack.c.l.b16 %v1011
    %v1077 = vunpack.c.l.b16 %v1012
    %v1078 = vunpack.c.l.b16 %v1013
    %v1079 = vunpack.c.l.b16 %v1014
    %v1080 = vunpack.c.l.b16 %v1015
    %v1081 = vunpack.c.l.b16 %v1016
    %v1082 = vunpack.c.l.b16 %v1017
    %v1083 = vunpack.c.l.b16 %v1018
    %v1084 = vunpack.c.l.b16 %v1019
    %v1085 = vunpack.c.l.b16 %v1020
    %v1086 = vunpack.c.l.b16 %v1021
    %v1087 = vunpack.c.l.b16 %v1022
    %v1088 = vunpack.c.l.b16 %v1023
    %v1089 = vunpack.c.l.b16 %v1024
    %v1090 = vunpack.c.l.b16 %v1025
    %v1091 = vunpack.c.l.b16 %v1026
    %v1092 = vunpack.c.l.b16 %v1027
    %v1093 = vunpack.c.l.b16 %v1028
    %v1094 = vunpack.c.l.b16 %v1029
    %v1095 = vunpack.c.l.b16 %v1030
    %v1096 = vunpack.c.l.b16 %v1031
    %v1097 = vunpack.c.l.b16 %v1032
    %v1098 = vunpack.c.l.b16 %v1033
    %v1099 = vunpack.c.l.b16 %v1034
    %v1100 = vunpack.c.l.b16 %v1035
    %v1101 = vunpack.c.l.b16 %v1036
    %v1102 = vpack.c.b16 %v1071, %v1070
    %v1103 = vpack.c.b16 %v1073, %v1072
    %v1104 = vpack.c.b16 %v1075, %v1074
    %v1105 = vpack.c.b16 %v1077, %v1076
    %v1106 = vpack.c.b16 %v1079, %v1078
    %v1107 = vpack.c.b16 %v1081, %v1080
    %v1108 = vpack.c.b16 %v1083, %v1082
    %v1109 = vpack.c.b16 %v1085, %v1084
    %v1110 = vpack.c.b16 %v1087, %v1086
    %v1111 = vpack.c.b16 %v1089, %v1088
    %v1112 = vpack.c.b16 %v1091, %v1090
    %v1113 = vpack.c.b16 %v1093, %v1092
    %v1114 = vpack.c.b16 %v1095, %v1094
    %v1115 = vpack.c.b16 %v1097, %v1096
    %v1116 = vpack.c.b16 %v1099, %v1098
    %v1117 = vpack.c.b16 %v1101, %v1100
    %1134 = vmatpush.bf16.msra.mxu0 %v1109
    %1135 = vmatpush.bf16.msra.mxu0 %v1108
    %1136 = vmatpush.bf16.msra.mxu0 %v1107
    %1137 = vmatpush.bf16.msra.mxu0 %v1106
    %1138 = vmatpush.bf16.msra.mxu0 %v1105
    %1139 = vmatpush.bf16.msra.mxu0 %v1104
    %1140 = vmatpush.bf16.msra.mxu0 %v1103
    %1141 = vmatpush.bf16.msra.mxu0 %v1102
    %1142 = vmatmul.bf16.gmra.mxu0 %v1003
    %v1143 = vpop.f32.mrf.mxu0
    %v1144 = vadd.f32 %v1037, %v1143
    %v1145 = vpop.f32.mrf.mxu0
    %v1146 = vadd.f32 %v1037, %v1145
    %1147 = vdwg.mxu0
    %1148 = vmatpush.bf16.msra.mxu0 %v1117
    %1149 = vmatpush.bf16.msra.mxu0 %v1116
    %1150 = vmatpush.bf16.msra.mxu0 %v1115
    %1151 = vmatpush.bf16.msra.mxu0 %v1114
    %1152 = vmatpush.bf16.msra.mxu0 %v1113
    %1153 = vmatpush.bf16.msra.mxu0 %v1112
    %1154 = vmatpush.bf16.msra.mxu0 %v1111
    %1155 = vmatpush.bf16.msra.mxu0 %v1110
    %1156 = vmatmul.bf16.gmra.mxu0 %v1004
    %v1157 = vpop.f32.mrf.mxu0
    %v1158 = vadd.f32 %v1144, %v1157
    %v1159 = vpop.f32.mrf.mxu0
    %v1160 = vadd.f32 %v1146, %v1159
    %1161 = vdwg.mxu0
    %v1162 = vmax.f32 %v1158, 0.0
    %v1163 = vmax.f32 %v1160, 0.0
    %v1164 = vpack.c.bf16 %v1163, %v1162
    %v1165 = vld [vmem:[#allocation10] sm:$0xf]
    %v1166 = vld [vmem:[#allocation10 + $0x4] sm:$0xf]
    %v1167 = vld [vmem:[#allocation10 + $0x8] sm:$0xf]
    %v1168 = vld [vmem:[#allocation10 + $0xc] sm:$0xf]
    %v1169 = vld [vmem:[#allocation10 + $0x10] sm:$0xf]
    %v1170 = vld [vmem:[#allocation10 + $0x14] sm:$0xf]
    %v1171 = vld [vmem:[#allocation10 + $0x18] sm:$0xf]
    %v1172 = vld [vmem:[#allocation10 + $0x1c] sm:$0xf]
    %v1173 = vld [vmem:[#allocation10 + $0x20] sm:$0xf]
    %v1174 = vld [vmem:[#allocation10 + $0x24] sm:$0xf]
    %v1175 = vld [vmem:[#allocation10 + $0x28] sm:$0xf]
    %v1176 = vld [vmem:[#allocation10 + $0x2c] sm:$0xf]
    %v1177 = vld [vmem:[#allocation10 + $0x30] sm:$0xf]
    %v1178 = vld [vmem:[#allocation10 + $0x34] sm:$0xf]
    %v1179 = vld [vmem:[#allocation10 + $0x38] sm:$0xf]
    %v1180 = vld [vmem:[#allocation10 + $0x3c] sm:$0xf]
    %v1181 = vld [vmem:[#allocation11 + $0x3] ss:$0 sm:$0xff]
    %v1198 = vunpack.c.l.b16 %v1165
    %v1199 = vunpack.c.l.b16 %v1166
    %v1200 = vunpack.c.l.b16 %v1167
    %v1201 = vunpack.c.l.b16 %v1168
    %v1202 = vunpack.c.l.b16 %v1169
    %v1203 = vunpack.c.l.b16 %v1170
    %v1204 = vunpack.c.l.b16 %v1171
    %v1205 = vunpack.c.l.b16 %v1172
    %v1206 = vunpack.c.l.b16 %v1173
    %v1207 = vunpack.c.l.b16 %v1174
    %v1208 = vunpack.c.l.b16 %v1175
    %v1209 = vunpack.c.l.b16 %v1176
    %v1210 = vunpack.c.l.b16 %v1177
    %v1211 = vunpack.c.l.b16 %v1178
    %v1212 = vunpack.c.l.b16 %v1179
    %v1213 = vunpack.c.l.b16 %v1180
    %v1214 = vpack.c.b16 %v1199, %v1198
    %v1215 = vpack.c.b16 %v1201, %v1200
    %v1216 = vpack.c.b16 %v1203, %v1202
    %v1217 = vpack.c.b16 %v1205, %v1204
    %v1218 = vpack.c.b16 %v1207, %v1206
    %v1219 = vpack.c.b16 %v1209, %v1208
    %v1220 = vpack.c.b16 %v1211, %v1210
    %v1221 = vpack.c.b16 %v1213, %v1212
    %1230 = vmatpush.bf16.msra.mxu0 %v1221
    %1231 = vmatpush.bf16.msra.mxu0 %v1220
    %1232 = vmatpush.bf16.msra.mxu0 %v1219
    %1233 = vmatpush.bf16.msra.mxu0 %v1218
    %1234 = vmatpush.bf16.msra.mxu0 %v1217
    %1235 = vmatpush.bf16.msra.mxu0 %v1216
    %1236 = vmatpush.bf16.msra.mxu0 %v1215
    %1237 = vmatpush.bf16.msra.mxu0 %v1214
    %1238 = vmatmul.bf16.gmra.mxu0 %v1164
    %v1239 = vpop.f32.mrf.mxu0
    %v1240 = vadd.f32 %v1181, %v1239
    %v1241 = vpop.f32.mrf.mxu0
    %v1242 = vadd.f32 %v1181, %v1241
    %1243 = vdwg.mxu0
    %v1244 = vpack.c.bf16 %v1240, %v1240
    %v1245 = vpack.c.bf16 %v1242, %v1242
    %1246 = vst [vmem:[#allocation13] sm:$0xf] %v1244
    %1247 = vst [vmem:[#allocation13 + $0x4] sm:$0xf] %v1245
    // Predicated region
    $region50: #{tpu_custom_call.1} parent=1 // pred_check
      _
    $region51: #{tpu_custom_call.1} parent=1 // pred_check_branch
      %1249 = sbr.rel (0) target = $region53
    $region52: #{tpu_custom_call.1} parent=1 // pred_region
      %1251 = vsyncadd [#allocation4], 0
      %s1252 = sshll.u32 [#allocation13], 4
      %s1253 = int_to_ptr.vmem [resolvable:$true] %s1252
      %s1254 = sshll.u32 %s6, 4
      %s1255 = int_to_ptr.hbm [resolvable:$true] %s1254
      %1260 = dma.vmem_to_hbm [thread:$0]  %s1253, 128, %s1255, [#allocation4], 64, 64, 4
    $region53: #{tpu_custom_call.1} parent=1 // pred_fallthru
      _
    // Predicated region
    $region54: #{tpu_custom_call.1} parent=1 // pred_check
      _
    $region55: #{tpu_custom_call.1} parent=1 // pred_check_branch
      %1262 = sbr.rel (0) target = $region57
    $region56: #{tpu_custom_call.1} parent=1 // pred_region
      %1264 = dma.done [#allocation4], 128
    $region57: #{tpu_custom_call.1} parent=1 // pred_fallthru
      _
    %1265 = vsyncpa [#allocation3], 1
    %1266 = vsyncpa [#allocation6], 1
    %1267 = vsyncpa [#allocation9], 1
    %1268 = vsyncpa [#allocation12], 1
    %1269 = vsyncpa [#allocation4], 1

</llo_original>
